<compile_context>
chip_gen: v7x
topology: tpu7x:2x2x1
jax: 0.10.0
libtpu: 0.0.40
codegen_flags: <defaults>
</compile_context>

<pallas_src>
import numpy as np
import jax
import jax.numpy as jnp
from jax.experimental import pallas as pl
from jax.experimental.pallas import tpu as pltpu

OUT_PAD = 128  # padded lane width of the Q-value output


def _listener_q_kernel(x_ref, w1_ref, b1_ref, w2_ref, b2_ref,
                       w3_ref, b3_ref, w4_ref, b4_ref, out_ref):
    # bf16 MXU operands, f32 accumulate; bias + ReLU stay f32.
    x = x_ref[...].astype(jnp.bfloat16)
    h1 = jnp.maximum(
        jnp.dot(x, w1_ref[...], preferred_element_type=jnp.float32) + b1_ref[...], 0.0)
    h2 = jnp.maximum(
        jnp.dot(h1.astype(jnp.bfloat16), w2_ref[...],
                preferred_element_type=jnp.float32) + b2_ref[...], 0.0)
    z = jnp.maximum(
        jnp.dot(h2.astype(jnp.bfloat16), w3_ref[...],
                preferred_element_type=jnp.float32) + b3_ref[...], 0.0)
    q = jnp.dot(z.astype(jnp.bfloat16), w4_ref[...],
                preferred_element_type=jnp.float32) + b4_ref[...]
    out_ref[...] = q.astype(out_ref.dtype)


def _round_up(x, m):
    return ((x + m - 1) // m) * m


def listener_q_forward(x, fused, action_dim, *, tile_b=1024, out_dtype=jnp.bfloat16):
    """x: (B, obs_dim) float32.  fused: dict from fuse_params().  Returns (B, action_dim)."""
    B, obs_dim = x.shape

    # Batch tile: multiple of 8, no bigger than the (rounded-up) batch, and capped
    # so the batch grid has >= 2 steps when possible (v7x megacore sharding).
    tile_b = max(8, (min(tile_b, _round_up(B, 8)) // 8) * 8)
    tile_b = max(8, min(tile_b, _round_up(pl.cdiv(B, 2), 8)))
    grid_b = pl.cdiv(B, tile_b)  # ragged last block is write-masked; no wrapper pad

    operands = (x, fused["w1"], fused["b1"], fused["w2"], fused["b2"],
                fused["w3"], fused["b3"], fused["w4"], fused["b4"])

    in_specs = [pl.BlockSpec((tile_b, obs_dim), lambda i: (i, 0))]  # batch-tiled input
    for op in operands[1:]:                                          # VMEM-resident params
        in_specs.append(pl.BlockSpec(op.shape, lambda i: (0, 0)))
    out_spec = pl.BlockSpec((tile_b, OUT_PAD), lambda i: (i, 0))

    flops = 2 * B * (obs_dim * 128 + 128 * 256 + 256 * 128 + 128 * OUT_PAD)
    bytes_accessed = int(
        B * obs_dim * x.dtype.itemsize
        + B * OUT_PAD * jnp.dtype(out_dtype).itemsize
        + sum(int(np.prod(p.shape)) * p.dtype.itemsize for p in operands[1:]))

    out = pl.pallas_call(
        _listener_q_kernel,
        out_shape=jax.ShapeDtypeStruct((B, OUT_PAD), out_dtype),
        grid_spec=pltpu.PrefetchScalarGridSpec(
            num_scalar_prefetch=0,
            grid=(grid_b,),
            in_specs=in_specs,
            out_specs=out_spec),
        compiler_params=pltpu.CompilerParams(
            dimension_semantics=("parallel",)),
        cost_estimate=pl.CostEstimate(
            flops=flops, transcendentals=0, bytes_accessed=bytes_accessed),
    )(*operands)
    return out[:, :action_dim]


def init_params(key, obs_dim, action_dim, comm_dim):
    """Per-branch weights matching the PyTorch module's shapes:
    orthogonal(gain=sqrt(2)) weights, zero biases.  Stored (in_features, out_features)."""
    other_dim = obs_dim - comm_dim
    ortho = jax.nn.initializers.orthogonal(scale=float(np.sqrt(2.0)))
    ks = jax.random.split(key, 6)

    def w(k, fi, fo):
        return ortho(k, (fi, fo), jnp.float32)

    def b(fo):
        return jnp.zeros((1, fo), jnp.float32)

    return {
        "w1c": w(ks[0], comm_dim, 64),  "b1c": b(64),
        "w2c": w(ks[1], 64, 128),       "b2c": b(128),
        "w1p": w(ks[2], other_dim, 64), "b1p": b(64),
        "w2p": w(ks[3], 64, 128),       "b2p": b(128),
        "w3":  w(ks[4], 256, 128),      "b3":  b(128),
        "w4":  w(ks[5], 128, action_dim), "b4": b(action_dim),
    }


def fuse_params(p, obs_dim, comm_dim, action_dim):
    """One-time repack of per-branch weights into block-diagonal fused weights.

    Layout (must match cat([comm_features, pos_vel_features]) order used by w3):
      x columns:  [0, other_dim) = pos_vel, [other_dim, obs_dim) = comm
      h1 columns: [0, 64)  = comm branch layer-1, [64, 128)  = pos_vel branch layer-1
      h2 columns: [0, 128) = comm_features,       [128, 256) = pos_vel_features
    Weights are stored bf16 (MXU operands); biases stay f32 (added post-accumulate).
    """
    other_dim = obs_dim - comm_dim

    w1 = jnp.zeros((obs_dim, 128), jnp.float32)
    w1 = w1.at[other_dim:, 0:64].set(p["w1c"])
    w1 = w1.at[:other_dim, 64:128].set(p["w1p"])
    b1 = jnp.concatenate([p["b1c"], p["b1p"]], axis=1)            # (1, 128)

    w2 = jnp.zeros((128, 256), jnp.float32)
    w2 = w2.at[0:64, 0:128].set(p["w2c"])
    w2 = w2.at[64:128, 128:256].set(p["w2p"])
    b2 = jnp.concatenate([p["b2c"], p["b2p"]], axis=1)            # (1, 256)

    w4 = jnp.zeros((128, OUT_PAD), jnp.float32).at[:, :action_dim].set(p["w4"])
    b4 = jnp.zeros((1, OUT_PAD), jnp.float32).at[:, :action_dim].set(p["b4"])

    return {"w1": w1.astype(jnp.bfloat16), "b1": b1,
            "w2": w2.astype(jnp.bfloat16), "b2": b2,
            "w3": p["w3"].astype(jnp.bfloat16), "b3": p["b3"],
            "w4": w4.astype(jnp.bfloat16), "b4": b4}


def reference_forward(x, p, comm_dim):
    """Pure-JAX f32 reference mirroring the PyTorch forward exactly."""
    comm = x[:, -comm_dim:]
    pos_vel = x[:, :-comm_dim]
    c = jnp.maximum(comm @ p["w1c"] + p["b1c"], 0.0)
    c = jnp.maximum(c @ p["w2c"] + p["b2c"], 0.0)
    pv = jnp.maximum(pos_vel @ p["w1p"] + p["b1p"], 0.0)
    pv = jnp.maximum(pv @ p["w2p"] + p["b2p"], 0.0)
    comb = jnp.concatenate([c, pv], axis=1)
    z = jnp.maximum(comb @ p["w3"] + p["b3"], 0.0)
    return z @ p["w4"] + p["b4"]


if __name__ == "__main__":
    obs_dim, comm_dim, action_dim = 16, 6, 5

    key = jax.random.PRNGKey(0)
    k_x1, k_x2, k_p = jax.random.split(key, 3)

    params = init_params(k_p, obs_dim, action_dim, comm_dim)
    fused = fuse_params(params, obs_dim, comm_dim, action_dim)

    # Test 1: small batch, evenly divided grid.
    B1 = 8
    x1 = jax.random.normal(k_x1, (B1, obs_dim), dtype=jnp.float32)
    out1 = jax.block_until_ready(listener_q_forward(x1, fused, action_dim))
    ref1 = reference_forward(x1, params, comm_dim)
    np.testing.assert_allclose(np.asarray(out1.astype(jnp.float32)), np.asarray(ref1),
                               rtol=3e-2, atol=8e-2)

    # Test 2: ragged last block (B not divisible by tile_b) — no wrapper pad.
    B2 = 20
    x2 = jax.random.normal(k_x2, (B2, obs_dim), dtype=jnp.float32)
    out2 = jax.block_until_ready(listener_q_forward(x2, fused, action_dim, tile_b=16))
    ref2 = reference_forward(x2, params, comm_dim)
    np.testing.assert_allclose(np.asarray(out2.astype(jnp.float32)), np.asarray(ref2),
                               rtol=3e-2, atol=8e-2)

    print("KERNEL_OK")
</pallas_src>

<mosaic_0001>
module attributes {stable_mosaic.version = 11 : i64} {
  func.func @_listener_q_kernel(%arg0: i32, %arg1: memref<8x16xf32, #tpu.memory_space<vmem>>, %arg2: memref<16x128xbf16, #tpu.memory_space<vmem>>, %arg3: memref<1x128xf32, #tpu.memory_space<vmem>>, %arg4: memref<128x256xbf16, #tpu.memory_space<vmem>>, %arg5: memref<1x256xf32, #tpu.memory_space<vmem>>, %arg6: memref<256x128xbf16, #tpu.memory_space<vmem>>, %arg7: memref<1x128xf32, #tpu.memory_space<vmem>>, %arg8: memref<128x128xbf16, #tpu.memory_space<vmem>>, %arg9: memref<1x128xf32, #tpu.memory_space<vmem>>, %arg10: memref<8x128xbf16, #tpu.memory_space<vmem>>) attributes {dimension_semantics = [#tpu.dimension_semantics<parallel>], iteration_bounds = array<i64: 1>, scalar_prefetch = 0 : i64, scratch_operands = 0 : i64, tpu.core_type = #tpu.core_type<tc>, window_params = [{transform_indices = @transform_0, window_bounds = array<i64: 8, 16>}, {pipeline_mode = #tpu.pipeline_mode<synchronous>, transform_indices = @transform_1, window_bounds = array<i64: 16, 128>}, {pipeline_mode = #tpu.pipeline_mode<synchronous>, transform_indices = @transform_2, window_bounds = array<i64: 1, 128>}, {pipeline_mode = #tpu.pipeline_mode<synchronous>, transform_indices = @transform_3, window_bounds = array<i64: 128, 256>}, {pipeline_mode = #tpu.pipeline_mode<synchronous>, transform_indices = @transform_4, window_bounds = array<i64: 1, 256>}, {pipeline_mode = #tpu.pipeline_mode<synchronous>, transform_indices = @transform_5, window_bounds = array<i64: 256, 128>}, {pipeline_mode = #tpu.pipeline_mode<synchronous>, transform_indices = @transform_6, window_bounds = array<i64: 1, 128>}, {pipeline_mode = #tpu.pipeline_mode<synchronous>, transform_indices = @transform_7, window_bounds = array<i64: 128, 128>}, {pipeline_mode = #tpu.pipeline_mode<synchronous>, transform_indices = @transform_8, window_bounds = array<i64: 1, 128>}, {transform_indices = @transform_9, window_bounds = array<i64: 8, 128>}]} {
    %c0 = arith.constant 0 : index
    %c0_0 = arith.constant 0 : index
    %0 = vector.load %arg1[%c0, %c0_0] : memref<8x16xf32, #tpu.memory_space<vmem>>, vector<8x16xf32>
    %1 = arith.truncf %0 : vector<8x16xf32> to vector<8x16xbf16>
    %c0_1 = arith.constant 0 : index
    %c0_2 = arith.constant 0 : index
    %2 = vector.load %arg2[%c0_1, %c0_2] : memref<16x128xbf16, #tpu.memory_space<vmem>>, vector<16x128xbf16>
    %cst = arith.constant dense<0.000000e+00> : vector<8x128xf32>
    %3 = tpu.matmul %1, %2, %cst {dimension_numbers = #tpu.dot_dimension_numbers<[1], [0], [0], [1], [0, 0, 1, 1], [], []>} : vector<8x16xbf16>, vector<16x128xbf16>, vector<8x128xf32> -> vector<8x128xf32>
    %c0_3 = arith.constant 0 : index
    %c0_4 = arith.constant 0 : index
    %4 = vector.load %arg3[%c0_3, %c0_4] : memref<1x128xf32, #tpu.memory_space<vmem>>, vector<1x128xf32>
    %5 = vector.broadcast %4 : vector<1x128xf32> to vector<8x128xf32>
    %6 = arith.addf %3, %5 : vector<8x128xf32>
    %cst_5 = arith.constant 0.000000e+00 : f32
    %7 = vector.broadcast %cst_5 : f32 to vector<8x128xf32>
    %8 = arith.maximumf %6, %7 : vector<8x128xf32>
    %9 = arith.truncf %8 : vector<8x128xf32> to vector<8x128xbf16>
    %c0_6 = arith.constant 0 : index
    %c0_7 = arith.constant 0 : index
    %10 = vector.load %arg4[%c0_6, %c0_7] : memref<128x256xbf16, #tpu.memory_space<vmem>>, vector<128x256xbf16>
    %cst_8 = arith.constant dense<0.000000e+00> : vector<8x256xf32>
    %11 = tpu.matmul %9, %10, %cst_8 {dimension_numbers = #tpu.dot_dimension_numbers<[1], [0], [0], [1], [0, 0, 1, 1], [], []>} : vector<8x128xbf16>, vector<128x256xbf16>, vector<8x256xf32> -> vector<8x256xf32>
    %c0_9 = arith.constant 0 : index
    %c0_10 = arith.constant 0 : index
    %12 = vector.load %arg5[%c0_9, %c0_10] : memref<1x256xf32, #tpu.memory_space<vmem>>, vector<1x256xf32>
    %13 = vector.broadcast %12 : vector<1x256xf32> to vector<8x256xf32>
    %14 = arith.addf %11, %13 : vector<8x256xf32>
    %cst_11 = arith.constant 0.000000e+00 : f32
    %15 = vector.broadcast %cst_11 : f32 to vector<8x256xf32>
    %16 = arith.maximumf %14, %15 : vector<8x256xf32>
    %17 = arith.truncf %16 : vector<8x256xf32> to vector<8x256xbf16>
    %c0_12 = arith.constant 0 : index
    %c0_13 = arith.constant 0 : index
    %18 = vector.load %arg6[%c0_12, %c0_13] : memref<256x128xbf16, #tpu.memory_space<vmem>>, vector<256x128xbf16>
    %cst_14 = arith.constant dense<0.000000e+00> : vector<8x128xf32>
    %19 = tpu.matmul %17, %18, %cst_14 {dimension_numbers = #tpu.dot_dimension_numbers<[1], [0], [0], [1], [0, 0, 1, 1], [], []>} : vector<8x256xbf16>, vector<256x128xbf16>, vector<8x128xf32> -> vector<8x128xf32>
    %c0_15 = arith.constant 0 : index
    %c0_16 = arith.constant 0 : index
    %20 = vector.load %arg7[%c0_15, %c0_16] : memref<1x128xf32, #tpu.memory_space<vmem>>, vector<1x128xf32>
    %21 = vector.broadcast %20 : vector<1x128xf32> to vector<8x128xf32>
    %22 = arith.addf %19, %21 : vector<8x128xf32>
    %cst_17 = arith.constant 0.000000e+00 : f32
    %23 = vector.broadcast %cst_17 : f32 to vector<8x128xf32>
    %24 = arith.maximumf %22, %23 : vector<8x128xf32>
    %25 = arith.truncf %24 : vector<8x128xf32> to vector<8x128xbf16>
    %c0_18 = arith.constant 0 : index
    %c0_19 = arith.constant 0 : index
    %26 = vector.load %arg8[%c0_18, %c0_19] : memref<128x128xbf16, #tpu.memory_space<vmem>>, vector<128x128xbf16>
    %cst_20 = arith.constant dense<0.000000e+00> : vector<8x128xf32>
    %27 = tpu.matmul %25, %26, %cst_20 {dimension_numbers = #tpu.dot_dimension_numbers<[1], [0], [0], [1], [0, 0, 1, 1], [], []>} : vector<8x128xbf16>, vector<128x128xbf16>, vector<8x128xf32> -> vector<8x128xf32>
    %c0_21 = arith.constant 0 : index
    %c0_22 = arith.constant 0 : index
    %28 = vector.load %arg9[%c0_21, %c0_22] : memref<1x128xf32, #tpu.memory_space<vmem>>, vector<1x128xf32>
    %29 = vector.broadcast %28 : vector<1x128xf32> to vector<8x128xf32>
    %30 = arith.addf %27, %29 : vector<8x128xf32>
    %31 = arith.truncf %30 : vector<8x128xf32> to vector<8x128xbf16>
    %c0_23 = arith.constant 0 : index
    %c0_24 = arith.constant 0 : index
    %32 = vector.load %arg10[%c0_23, %c0_24] : memref<8x128xbf16, #tpu.memory_space<vmem>>, vector<8x128xbf16>
    tpu.vector_store %arg10[%c0_23, %c0_24], %31 {strides = array<i32>} : memref<8x128xbf16, #tpu.memory_space<vmem>>, vector<8x128xbf16>,
    return
  }
  func.func @transform_0(%arg0: i32) -> (i32, i32) {
    %c0_i32 = arith.constant 0 : i32
    %c0_i32_0 = arith.constant 0 : i32
    return %arg0, %c0_i32 : i32, i32
  }
  func.func @transform_1(%arg0: i32) -> (i32, i32) {
    %c0_i32 = arith.constant 0 : i32
    %c0_i32_0 = arith.constant 0 : i32
    %c0_i32_1 = arith.constant 0 : i32
    return %c0_i32, %c0_i32_0 : i32, i32
  }
  func.func @transform_2(%arg0: i32) -> (i32, i32) {
    %c0_i32 = arith.constant 0 : i32
    %c0_i32_0 = arith.constant 0 : i32
    %c0_i32_1 = arith.constant 0 : i32
    return %c0_i32, %c0_i32_0 : i32, i32
  }
  func.func @transform_3(%arg0: i32) -> (i32, i32) {
    %c0_i32 = arith.constant 0 : i32
    %c0_i32_0 = arith.constant 0 : i32
    %c0_i32_1 = arith.constant 0 : i32
    return %c0_i32, %c0_i32_0 : i32, i32
  }
  func.func @transform_4(%arg0: i32) -> (i32, i32) {
    %c0_i32 = arith.constant 0 : i32
    %c0_i32_0 = arith.constant 0 : i32
    %c0_i32_1 = arith.constant 0 : i32
    return %c0_i32, %c0_i32_0 : i32, i32
  }
  func.func @transform_5(%arg0: i32) -> (i32, i32) {
    %c0_i32 = arith.constant 0 : i32
    %c0_i32_0 = arith.constant 0 : i32
    %c0_i32_1 = arith.constant 0 : i32
    return %c0_i32, %c0_i32_0 : i32, i32
  }
  func.func @transform_6(%arg0: i32) -> (i32, i32) {
    %c0_i32 = arith.constant 0 : i32
    %c0_i32_0 = arith.constant 0 : i32
    %c0_i32_1 = arith.constant 0 : i32
    return %c0_i32, %c0_i32_0 : i32, i32
  }
  func.func @transform_7(%arg0: i32) -> (i32, i32) {
    %c0_i32 = arith.constant 0 : i32
    %c0_i32_0 = arith.constant 0 : i32
    %c0_i32_1 = arith.constant 0 : i32
    return %c0_i32, %c0_i32_0 : i32, i32
  }
  func.func @transform_8(%arg0: i32) -> (i32, i32) {
    %c0_i32 = arith.constant 0 : i32
    %c0_i32_0 = arith.constant 0 : i32
    %c0_i32_1 = arith.constant 0 : i32
    return %c0_i32, %c0_i32_0 : i32, i32
  }
  func.func @transform_9(%arg0: i32) -> (i32, i32) {
    %c0_i32 = arith.constant 0 : i32
    %c0_i32_0 = arith.constant 0 : i32
    return %arg0, %c0_i32 : i32, i32
  }
}

</mosaic_0001>

<llo_original>
// kernel: tpu_custom_call.1
$region0: #{tpu_custom_call.1}
  #allocation0 [shape = 'u32[]', space=smem, size = 0x4, offset = 0x4, fixed_abs, tag = 'smem constant byte address 0x4 - core index']
  #allocation1 [shape = 'u32[144,128]{1,0:T(1,128)}', space=vmem, size = 0x12000, scoped, tag = 'internal scratch']
  %s0 = inlined_call_operand.hbm [shape: f32[8,16], index: 0, kind: input, shape index: {}]
  %s1 = inlined_call_operand.hbm [shape: bf16[16,128], index: 1, kind: input, shape index: {}]
  %s2 = inlined_call_operand.vmem [shape: f32[1,128], index: 2, kind: input, shape index: {}]
  %s3 = inlined_call_operand.hbm [shape: bf16[128,256], index: 3, kind: input, shape index: {}]
  %s4 = inlined_call_operand.vmem [shape: f32[1,256], index: 4, kind: input, shape index: {}]
  %s5 = inlined_call_operand.hbm [shape: bf16[256,128], index: 5, kind: input, shape index: {}]
  %s6 = inlined_call_operand.vmem [shape: f32[1,128], index: 6, kind: input, shape index: {}]
  %s7 = inlined_call_operand.hbm [shape: bf16[128,128], index: 7, kind: input, shape index: {}]
  %s8 = inlined_call_operand.vmem [shape: f32[1,128], index: 8, kind: input, shape index: {}]
  %s9 = inlined_call_operand.hbm [shape: bf16[8,128], index: 9, kind: output, shape index: {}]
  %s10 = sld [smem:[#allocation0]]
  $region66: #{tpu_custom_call.1} parent=0
    _
  %s12 = ssub.s32 1, %s10
  %s13 = scalar_select 0, %s12, %s10
  $region1: #{tpu_custom_call.1} parent=0
    #allocation2 [shape = 'u8[4096]{0}', space=vmem, size = 0x1000, scoped, tag = 'input window, operand 0, single buffered']
    #allocation3 [shape = 's32[1]{0}', space=sflag, size = 0x4, scoped, tag = 'scoped memory for tpu_custom_call.1']
    #allocation4 [shape = 's32[1]{0}', space=sflag, size = 0x4, scoped, tag = 'scoped memory for tpu_custom_call.1']
    #allocation5 [shape = 'u8[4096]{0}', space=vmem, size = 0x1000, scoped, tag = 'input window, operand 1, single buffered']
    #allocation6 [shape = 's32[1]{0}', space=sflag, size = 0x4, scoped, tag = 'scoped memory for tpu_custom_call.1']
    #allocation7 [shape = 'u8[65536]{0}', space=vmem, size = 0x10000, scoped, tag = 'input window, operand 3, single buffered']
    #allocation8 [shape = 'u8[65536]{0}', space=vmem, size = 0x10000, scoped, tag = 'input window, operand 5, single buffered']
    #allocation9 [shape = 's32[1]{0}', space=sflag, size = 0x4, scoped, tag = 'scoped memory for tpu_custom_call.1']
    #allocation10 [shape = 'u8[32768]{0}', space=vmem, size = 0x8000, scoped, tag = 'input window, operand 7, single buffered']
    #allocation11 [shape = 'u8[2048]{0}', space=vmem, size = 0x800, scoped, tag = 'output window, operand 0, single buffered']
    %14 = vsyncpa [#allocation3], 0
    %15 = vsyncpa [#allocation6], 0
    %16 = vsyncpa [#allocation9], 0
    %17 = vsyncpa [#allocation4], 0
    // Predicated region
    $region2: #{tpu_custom_call.1} parent=1 // pred_check
      _
    $region3: #{tpu_custom_call.1} parent=1 // pred_check_branch
      %19 = sbr.rel (0) target = $region5
    $region4: #{tpu_custom_call.1} parent=1 // pred_region
      %s21 = ssub.s32 128, 128
      %22 = vsyncadd [#allocation3], %s21
      %s24 = sshll.u32 [#allocation2], 4
      %s25 = int_to_ptr.vmem [resolvable:$true] %s24
      %27 = dma.hbm_to_vmem [thread:$0]  %s0, 128, %s25, [#allocation3]
    $region5: #{tpu_custom_call.1} parent=1 // pred_fallthru
      _
    // Predicated region
    $region6: #{tpu_custom_call.1} parent=1 // pred_check
      _
    $region7: #{tpu_custom_call.1} parent=1 // pred_check_branch
      %29 = sbr.rel (0) target = $region9
    $region8: #{tpu_custom_call.1} parent=1 // pred_region
      %s31 = ssub.s32 128, 128
      %32 = vsyncadd [#allocation6], %s31
      %s33 = sshll.u32 [#allocation5], 4
      %s34 = int_to_ptr.vmem [resolvable:$true] %s33
      %39 = dma.hbm_to_vmem [thread:$0]  %s1, 128, %s34, [#allocation6], 64, 64, 4
    $region9: #{tpu_custom_call.1} parent=1 // pred_fallthru
      _
    // Predicated region
    $region10: #{tpu_custom_call.1} parent=1 // pred_check
      _
    $region11: #{tpu_custom_call.1} parent=1 // pred_check_branch
      %41 = sbr.rel (0) target = $region13
    $region12: #{tpu_custom_call.1} parent=1 // pred_region
      _
    $region13: #{tpu_custom_call.1} parent=1 // pred_fallthru
      _
    // Predicated region
    $region14: #{tpu_custom_call.1} parent=1 // pred_check
      _
    $region15: #{tpu_custom_call.1} parent=1 // pred_check_branch
      %43 = sbr.rel (0) target = $region17
    $region16: #{tpu_custom_call.1} parent=1 // pred_region
      %s45 = ssub.s32 2048, 2048
      %46 = vsyncadd [#allocation6], %s45
      %s47 = sshll.u32 [#allocation7], 4
      %s48 = int_to_ptr.vmem [resolvable:$true] %s47
      %53 = dma.hbm_to_vmem [thread:$0]  %s3, 2048, %s48, [#allocation6], 128, 128, 8
    $region17: #{tpu_custom_call.1} parent=1 // pred_fallthru
      _
    // Predicated region
    $region18: #{tpu_custom_call.1} parent=1 // pred_check
      _
    $region19: #{tpu_custom_call.1} parent=1 // pred_check_branch
      %55 = sbr.rel (0) target = $region21
    $region20: #{tpu_custom_call.1} parent=1 // pred_region
      _
    $region21: #{tpu_custom_call.1} parent=1 // pred_fallthru
      _
    // Predicated region
    $region22: #{tpu_custom_call.1} parent=1 // pred_check
      _
    $region23: #{tpu_custom_call.1} parent=1 // pred_check_branch
      %57 = sbr.rel (0) target = $region25
    $region24: #{tpu_custom_call.1} parent=1 // pred_region
      %s59 = ssub.s32 2048, 2048
      %60 = vsyncadd [#allocation9], %s59
      %s61 = sshll.u32 [#allocation8], 4
      %s62 = int_to_ptr.vmem [resolvable:$true] %s61
      %67 = dma.hbm_to_vmem [thread:$0]  %s5, 2048, %s62, [#allocation9], 64, 64, 4
    $region25: #{tpu_custom_call.1} parent=1 // pred_fallthru
      _
    // Predicated region
    $region26: #{tpu_custom_call.1} parent=1 // pred_check
      _
    $region27: #{tpu_custom_call.1} parent=1 // pred_check_branch
      %69 = sbr.rel (0) target = $region29
    $region28: #{tpu_custom_call.1} parent=1 // pred_region
      _
    $region29: #{tpu_custom_call.1} parent=1 // pred_fallthru
      _
    // Predicated region
    $region30: #{tpu_custom_call.1} parent=1 // pred_check
      _
    $region31: #{tpu_custom_call.1} parent=1 // pred_check_branch
      %71 = sbr.rel (0) target = $region33
    $region32: #{tpu_custom_call.1} parent=1 // pred_region
      %s73 = ssub.s32 1024, 1024
      %74 = vsyncadd [#allocation9], %s73
      %s75 = sshll.u32 [#allocation10], 4
      %s76 = int_to_ptr.vmem [resolvable:$true] %s75
      %81 = dma.hbm_to_vmem [thread:$0]  %s7, 1024, %s76, [#allocation9], 64, 64, 4
    $region33: #{tpu_custom_call.1} parent=1 // pred_fallthru
      _
    // Predicated region
    $region34: #{tpu_custom_call.1} parent=1 // pred_check
      _
    $region35: #{tpu_custom_call.1} parent=1 // pred_check_branch
      %83 = sbr.rel (0) target = $region37
    $region36: #{tpu_custom_call.1} parent=1 // pred_region
      _
    $region37: #{tpu_custom_call.1} parent=1 // pred_fallthru
      _
    // Predicated region
    $region38: #{tpu_custom_call.1} parent=1 // pred_check
      _
    $region39: #{tpu_custom_call.1} parent=1 // pred_check_branch
      %85 = sbr.rel (0) target = $region41
    $region40: #{tpu_custom_call.1} parent=1 // pred_region
      %86 = dma.done [#allocation3], 128
    $region41: #{tpu_custom_call.1} parent=1 // pred_fallthru
      _
    // Predicated region
    $region42: #{tpu_custom_call.1} parent=1 // pred_check
      _
    $region43: #{tpu_custom_call.1} parent=1 // pred_check_branch
      %88 = sbr.rel (0) target = $region45
    $region44: #{tpu_custom_call.1} parent=1 // pred_region
      %89 = dma.done [#allocation6], 128
    $region45: #{tpu_custom_call.1} parent=1 // pred_fallthru
      _
    // Predicated region
    $region46: #{tpu_custom_call.1} parent=1 // pred_check
      _
    $region47: #{tpu_custom_call.1} parent=1 // pred_check_branch
      %91 = sbr.rel (0) target = $region49
    $region48: #{tpu_custom_call.1} parent=1 // pred_region
      %92 = dma.done [#allocation6], 2048
    $region49: #{tpu_custom_call.1} parent=1 // pred_fallthru
      _
    // Predicated region
    $region50: #{tpu_custom_call.1} parent=1 // pred_check
      _
    $region51: #{tpu_custom_call.1} parent=1 // pred_check_branch
      %94 = sbr.rel (0) target = $region53
    $region52: #{tpu_custom_call.1} parent=1 // pred_region
      %95 = dma.done [#allocation9], 2048
    $region53: #{tpu_custom_call.1} parent=1 // pred_fallthru
      _
    // Predicated region
    $region54: #{tpu_custom_call.1} parent=1 // pred_check
      _
    $region55: #{tpu_custom_call.1} parent=1 // pred_check_branch
      %97 = sbr.rel (0) target = $region57
    $region56: #{tpu_custom_call.1} parent=1 // pred_region
      %98 = dma.done [#allocation9], 1024
    $region57: #{tpu_custom_call.1} parent=1 // pred_fallthru
      _
    %v100 = vld [vmem:[#allocation2] sm:$0xff]
    %v101 = vpack.c.bf16 %v100, %v100
    %v102 = vld [vmem:[#allocation5] sm:$0xf]
    %v103 = vld [vmem:[#allocation5 + $0x4] sm:$0xf]
    %v104 = vld [vmem:[%s2] sm:$0x1]
    %v106 = vlaneseq
    %v107 = vshrl.u32 %v106, 7
    %v108 = vsub.s32 0, %v107
    %v109 = vrot.slane %v104, %v108
    %v113 = vunpack.c.l.b16 %v102
    %v114 = vunpack.c.l.b16 %v103
    %v115 = vpack.c.b16 %v114, %v113
    %vm117 = vcmask 130048
    %v119 = vsel %vm117, %v101, 0
    %121 = vmatprep.subr.bf16.mxu0 0
    %122 = vmatpush1.bf16.msra.mxu0 %v115
    %123 = vmatprep.subr.bf16.mxu0 0
    %124 = vmatpush1.bf16.msra.mxu0 0
    %125 = vmatprep.subr.bf16.mxu0 0
    %126 = vmatpush1.bf16.msra.mxu0 0
    %127 = vmatprep.subr.bf16.mxu0 0
    %128 = vmatpush1.bf16.msra.mxu0 0
    %129 = vmatprep.subr.bf16.mxu0 0
    %130 = vmatpush1.bf16.msra.mxu0 0
    %131 = vmatprep.subr.bf16.mxu0 0
    %132 = vmatpush1.bf16.msra.mxu0 0
    %133 = vmatprep.subr.bf16.mxu0 0
    %134 = vmatpush1.bf16.msra.mxu0 0
    %135 = vmatprep.subr.bf16.mxu0 0
    %136 = vmatpush1.bf16.msra.mxu0 0
    %137 = vmatprep.subr.bf16.mxu0 0
    %138 = vmatpush1.bf16.msra.mxu0 0
    %139 = vmatprep.subr.bf16.mxu0 0
    %140 = vmatpush1.bf16.msra.mxu0 0
    %141 = vmatprep.subr.bf16.mxu0 0
    %142 = vmatpush1.bf16.msra.mxu0 0
    %143 = vmatprep.subr.bf16.mxu0 0
    %144 = vmatpush1.bf16.msra.mxu0 0
    %145 = vmatprep.subr.bf16.mxu0 0
    %146 = vmatpush1.bf16.msra.mxu0 0
    %147 = vmatprep.subr.bf16.mxu0 0
    %148 = vmatpush1.bf16.msra.mxu0 0
    %149 = vmatprep.subr.bf16.mxu0 0
    %150 = vmatpush1.bf16.msra.mxu0 0
    %151 = vmatprep.subr.bf16.mxu0 0
    %152 = vmatpush1.bf16.msra.mxu0 0
    %153 = vmatprep.mubr.bf16.mxu0 0
    %154 = vmatmul.mubr.bf16.gmra.mrb[0].mxu0 %v119
    %v155 = vpop.f32.mrb[0].mxu0
    %v156 = vadd.f32 %v109, %v155
    %v157 = vpop.f32.mrb[0].mxu0
    %v158 = vpop.f32.mrb[0].mxu0
    %v159 = vpop.f32.mrb[0].mxu0
    %160 = vdwg.mxu0
    %v161 = vmax.f32 %v156, 0.0
    %v162 = vpack.c.bf16 %v161, %v161
    %v163 = vld [vmem:[#allocation7] sm:$0xff]
    %v164 = vld [vmem:[#allocation7 + $0x8] sm:$0xff]
    %v165 = vld [vmem:[#allocation7 + $0x10] sm:$0xff]
    %v166 = vld [vmem:[#allocation7 + $0x18] sm:$0xff]
    %v167 = vld [vmem:[#allocation7 + $0x20] sm:$0xff]
    %v168 = vld [vmem:[#allocation7 + $0x28] sm:$0xff]
    %v169 = vld [vmem:[#allocation7 + $0x30] sm:$0xff]
    %v170 = vld [vmem:[#allocation7 + $0x38] sm:$0xff]
    %v171 = vld [vmem:[#allocation7 + $0x40] sm:$0xff]
    %v172 = vld [vmem:[#allocation7 + $0x48] sm:$0xff]
    %v173 = vld [vmem:[#allocation7 + $0x50] sm:$0xff]
    %v174 = vld [vmem:[#allocation7 + $0x58] sm:$0xff]
    %v175 = vld [vmem:[#allocation7 + $0x60] sm:$0xff]
    %v176 = vld [vmem:[#allocation7 + $0x68] sm:$0xff]
    %v177 = vld [vmem:[#allocation7 + $0x70] sm:$0xff]
    %v178 = vld [vmem:[#allocation7 + $0x78] sm:$0xff]
    %v179 = vld [vmem:[%s4] sm:$0x3]
    %v181 = vlaneseq
    %v182 = vshrl.u32 %v181, 7
    %v183 = vsub.s32 0, %v182
    %v184 = vrot.slane %v179, %v183
    %v185 = vlaneseq
    %v186 = vshrl.u32 %v185, 7
    %v187 = vsub.s32 1, %v186
    %v188 = vrot.slane %v179, %v187
    %v207 = vunpack.c.l.b16 %v163
    %v208 = vunpack.c.h.b16 %v163
    %v209 = vunpack.c.l.b16 %v164
    %v210 = vunpack.c.h.b16 %v164
    %v211 = vunpack.c.l.b16 %v165
    %v212 = vunpack.c.h.b16 %v165
    %v213 = vunpack.c.l.b16 %v166
    %v214 = vunpack.c.h.b16 %v166
    %v215 = vunpack.c.l.b16 %v167
    %v216 = vunpack.c.h.b16 %v167
    %v217 = vunpack.c.l.b16 %v168
    %v218 = vunpack.c.h.b16 %v168
    %v219 = vunpack.c.l.b16 %v169
    %v220 = vunpack.c.h.b16 %v169
    %v221 = vunpack.c.l.b16 %v170
    %v222 = vunpack.c.h.b16 %v170
    %v223 = vunpack.c.l.b16 %v171
    %v224 = vunpack.c.h.b16 %v171
    %v225 = vunpack.c.l.b16 %v172
    %v226 = vunpack.c.h.b16 %v172
    %v227 = vunpack.c.l.b16 %v173
    %v228 = vunpack.c.h.b16 %v173
    %v229 = vunpack.c.l.b16 %v174
    %v230 = vunpack.c.h.b16 %v174
    %v231 = vunpack.c.l.b16 %v175
    %v232 = vunpack.c.h.b16 %v175
    %v233 = vunpack.c.l.b16 %v176
    %v234 = vunpack.c.h.b16 %v176
    %v235 = vunpack.c.l.b16 %v177
    %v236 = vunpack.c.h.b16 %v177
    %v237 = vunpack.c.l.b16 %v178
    %v238 = vunpack.c.h.b16 %v178
    %v239 = vpack.c.b16 %v209, %v207
    %v240 = vpack.c.b16 %v210, %v208
    %v241 = vpack.c.b16 %v213, %v211
    %v242 = vpack.c.b16 %v214, %v212
    %v243 = vpack.c.b16 %v217, %v215
    %v244 = vpack.c.b16 %v218, %v216
    %v245 = vpack.c.b16 %v221, %v219
    %v246 = vpack.c.b16 %v222, %v220
    %v247 = vpack.c.b16 %v225, %v223
    %v248 = vpack.c.b16 %v226, %v224
    %v249 = vpack.c.b16 %v229, %v227
    %v250 = vpack.c.b16 %v230, %v228
    %v251 = vpack.c.b16 %v233, %v231
    %v252 = vpack.c.b16 %v234, %v232
    %v253 = vpack.c.b16 %v237, %v235
    %v254 = vpack.c.b16 %v238, %v236
    %271 = vmatprep.subr.bf16.mxu0 %v240
    %272 = vmatpush1.bf16.msra.mxu0 %v239
    %273 = vmatprep.subr.bf16.mxu0 %v242
    %274 = vmatpush1.bf16.msra.mxu0 %v241
    %275 = vmatprep.subr.bf16.mxu0 %v244
    %276 = vmatpush1.bf16.msra.mxu0 %v243
    %277 = vmatprep.subr.bf16.mxu0 %v246
    %278 = vmatpush1.bf16.msra.mxu0 %v245
    %279 = vmatprep.subr.bf16.mxu0 %v248
    %280 = vmatpush1.bf16.msra.mxu0 %v247
    %281 = vmatprep.subr.bf16.mxu0 %v250
    %282 = vmatpush1.bf16.msra.mxu0 %v249
    %283 = vmatprep.subr.bf16.mxu0 %v252
    %284 = vmatpush1.bf16.msra.mxu0 %v251
    %285 = vmatprep.subr.bf16.mxu0 %v254
    %286 = vmatpush1.bf16.msra.mxu0 %v253
    %287 = vmatprep.subr.bf16.mxu0 0
    %288 = vmatpush1.bf16.msra.mxu0 0
    %289 = vmatprep.subr.bf16.mxu0 0
    %290 = vmatpush1.bf16.msra.mxu0 0
    %291 = vmatprep.subr.bf16.mxu0 0
    %292 = vmatpush1.bf16.msra.mxu0 0
    %293 = vmatprep.subr.bf16.mxu0 0
    %294 = vmatpush1.bf16.msra.mxu0 0
    %295 = vmatprep.subr.bf16.mxu0 0
    %296 = vmatpush1.bf16.msra.mxu0 0
    %297 = vmatprep.subr.bf16.mxu0 0
    %298 = vmatpush1.bf16.msra.mxu0 0
    %299 = vmatprep.subr.bf16.mxu0 0
    %300 = vmatpush1.bf16.msra.mxu0 0
    %301 = vmatprep.subr.bf16.mxu0 0
    %302 = vmatpush1.bf16.msra.mxu0 0
    %303 = vmatprep.mubr.bf16.mxu0 0
    %304 = vmatmul.mubr.bf16.gmra.mrb[0].mxu0 %v162
    %v305 = vpop.f32.mrb[0].mxu0
    %v306 = vadd.f32 %v184, %v305
    %v307 = vpop.f32.mrb[0].mxu0
    %v308 = vadd.f32 %v188, %v307
    %v309 = vpop.f32.mrb[0].mxu0
    %v310 = vpop.f32.mrb[0].mxu0
    %311 = vdwg.mxu0
    %v312 = vmax.f32 %v306, 0.0
    %v313 = vmax.f32 %v308, 0.0
    %v314 = vpack.c.bf16 %v312, %v312
    %v315 = vpack.c.bf16 %v313, %v313
    %v316 = vld [vmem:[#allocation8] sm:$0xf]
    %v317 = vld [vmem:[#allocation8 + $0x4] sm:$0xf]
    %v318 = vld [vmem:[#allocation8 + $0x8] sm:$0xf]
    %v319 = vld [vmem:[#allocation8 + $0xc] sm:$0xf]
    %v320 = vld [vmem:[#allocation8 + $0x10] sm:$0xf]
    %v321 = vld [vmem:[#allocation8 + $0x14] sm:$0xf]
    %v322 = vld [vmem:[#allocation8 + $0x18] sm:$0xf]
    %v323 = vld [vmem:[#allocation8 + $0x1c] sm:$0xf]
    %v324 = vld [vmem:[#allocation8 + $0x20] sm:$0xf]
    %v325 = vld [vmem:[#allocation8 + $0x24] sm:$0xf]
    %v326 = vld [vmem:[#allocation8 + $0x28] sm:$0xf]
    %v327 = vld [vmem:[#allocation8 + $0x2c] sm:$0xf]
    %v328 = vld [vmem:[#allocation8 + $0x30] sm:$0xf]
    %v329 = vld [vmem:[#allocation8 + $0x34] sm:$0xf]
    %v330 = vld [vmem:[#allocation8 + $0x38] sm:$0xf]
    %v331 = vld [vmem:[#allocation8 + $0x3c] sm:$0xf]
    %v332 = vld [vmem:[#allocation8 + $0x40] sm:$0xf]
    %v333 = vld [vmem:[#allocation8 + $0x44] sm:$0xf]
    %v334 = vld [vmem:[#allocation8 + $0x48] sm:$0xf]
    %v335 = vld [vmem:[#allocation8 + $0x4c] sm:$0xf]
    %v336 = vld [vmem:[#allocation8 + $0x50] sm:$0xf]
    %v337 = vld [vmem:[#allocation8 + $0x54] sm:$0xf]
    %v338 = vld [vmem:[#allocation8 + $0x58] sm:$0xf]
    %v339 = vld [vmem:[#allocation8 + $0x5c] sm:$0xf]
    %v340 = vld [vmem:[#allocation8 + $0x60] sm:$0xf]
    %v341 = vld [vmem:[#allocation8 + $0x64] sm:$0xf]
    %v342 = vld [vmem:[#allocation8 + $0x68] sm:$0xf]
    %v343 = vld [vmem:[#allocation8 + $0x6c] sm:$0xf]
    %v344 = vld [vmem:[#allocation8 + $0x70] sm:$0xf]
    %v345 = vld [vmem:[#allocation8 + $0x74] sm:$0xf]
    %v346 = vld [vmem:[#allocation8 + $0x78] sm:$0xf]
    %v347 = vld [vmem:[#allocation8 + $0x7c] sm:$0xf]
    %v348 = vld [vmem:[%s6] sm:$0x1]
    %v350 = vlaneseq
    %v351 = vshrl.u32 %v350, 7
    %v352 = vsub.s32 0, %v351
    %v353 = vrot.slane %v348, %v352
    %v387 = vunpack.c.l.b16 %v316
    %v388 = vunpack.c.l.b16 %v317
    %v389 = vunpack.c.l.b16 %v318
    %v390 = vunpack.c.l.b16 %v319
    %v391 = vunpack.c.l.b16 %v320
    %v392 = vunpack.c.l.b16 %v321
    %v393 = vunpack.c.l.b16 %v322
    %v394 = vunpack.c.l.b16 %v323
    %v395 = vunpack.c.l.b16 %v324
    %v396 = vunpack.c.l.b16 %v325
    %v397 = vunpack.c.l.b16 %v326
    %v398 = vunpack.c.l.b16 %v327
    %v399 = vunpack.c.l.b16 %v328
    %v400 = vunpack.c.l.b16 %v329
    %v401 = vunpack.c.l.b16 %v330
    %v402 = vunpack.c.l.b16 %v331
    %v403 = vunpack.c.l.b16 %v332
    %v404 = vunpack.c.l.b16 %v333
    %v405 = vunpack.c.l.b16 %v334
    %v406 = vunpack.c.l.b16 %v335
    %v407 = vunpack.c.l.b16 %v336
    %v408 = vunpack.c.l.b16 %v337
    %v409 = vunpack.c.l.b16 %v338
    %v410 = vunpack.c.l.b16 %v339
    %v411 = vunpack.c.l.b16 %v340
    %v412 = vunpack.c.l.b16 %v341
    %v413 = vunpack.c.l.b16 %v342
    %v414 = vunpack.c.l.b16 %v343
    %v415 = vunpack.c.l.b16 %v344
    %v416 = vunpack.c.l.b16 %v345
    %v417 = vunpack.c.l.b16 %v346
    %v418 = vunpack.c.l.b16 %v347
    %v419 = vpack.c.b16 %v388, %v387
    %v420 = vpack.c.b16 %v390, %v389
    %v421 = vpack.c.b16 %v392, %v391
    %v422 = vpack.c.b16 %v394, %v393
    %v423 = vpack.c.b16 %v396, %v395
    %v424 = vpack.c.b16 %v398, %v397
    %v425 = vpack.c.b16 %v400, %v399
    %v426 = vpack.c.b16 %v402, %v401
    %v427 = vpack.c.b16 %v404, %v403
    %v428 = vpack.c.b16 %v406, %v405
    %v429 = vpack.c.b16 %v408, %v407
    %v430 = vpack.c.b16 %v410, %v409
    %v431 = vpack.c.b16 %v412, %v411
    %v432 = vpack.c.b16 %v414, %v413
    %v433 = vpack.c.b16 %v416, %v415
    %v434 = vpack.c.b16 %v418, %v417
    %451 = vmatprep.subr.bf16.mxu0 0
    %452 = vmatpush1.bf16.msra.mxu0 %v419
    %453 = vmatprep.subr.bf16.mxu0 0
    %454 = vmatpush1.bf16.msra.mxu0 %v420
    %455 = vmatprep.subr.bf16.mxu0 0
    %456 = vmatpush1.bf16.msra.mxu0 %v421
    %457 = vmatprep.subr.bf16.mxu0 0
    %458 = vmatpush1.bf16.msra.mxu0 %v422
    %459 = vmatprep.subr.bf16.mxu0 0
    %460 = vmatpush1.bf16.msra.mxu0 %v423
    %461 = vmatprep.subr.bf16.mxu0 0
    %462 = vmatpush1.bf16.msra.mxu0 %v424
    %463 = vmatprep.subr.bf16.mxu0 0
    %464 = vmatpush1.bf16.msra.mxu0 %v425
    %465 = vmatprep.subr.bf16.mxu0 0
    %466 = vmatpush1.bf16.msra.mxu0 %v426
    %467 = vmatprep.subr.bf16.mxu0 0
    %468 = vmatpush1.bf16.msra.mxu0 %v427
    %469 = vmatprep.subr.bf16.mxu0 0
    %470 = vmatpush1.bf16.msra.mxu0 %v428
    %471 = vmatprep.subr.bf16.mxu0 0
    %472 = vmatpush1.bf16.msra.mxu0 %v429
    %473 = vmatprep.subr.bf16.mxu0 0
    %474 = vmatpush1.bf16.msra.mxu0 %v430
    %475 = vmatprep.subr.bf16.mxu0 0
    %476 = vmatpush1.bf16.msra.mxu0 %v431
    %477 = vmatprep.subr.bf16.mxu0 0
    %478 = vmatpush1.bf16.msra.mxu0 %v432
    %479 = vmatprep.subr.bf16.mxu0 0
    %480 = vmatpush1.bf16.msra.mxu0 %v433
    %481 = vmatprep.subr.bf16.mxu0 0
    %482 = vmatpush1.bf16.msra.mxu0 %v434
    %483 = vmatprep.mubr.bf16.mxu0 %v315
    %484 = vmatmul.mubr.bf16.gmra.mrb[0].mxu0 %v314
    %v485 = vpop.f32.mrb[0].mxu0
    %v486 = vadd.f32 %v353, %v485
    %v487 = vpop.f32.mrb[0].mxu0
    %v488 = vpop.f32.mrb[0].mxu0
    %v489 = vpop.f32.mrb[0].mxu0
    %490 = vdwg.mxu0
    %v491 = vmax.f32 %v486, 0.0
    %v492 = vpack.c.bf16 %v491, %v491
    %v493 = vld [vmem:[#allocation10] sm:$0xf]
    %v494 = vld [vmem:[#allocation10 + $0x4] sm:$0xf]
    %v495 = vld [vmem:[#allocation10 + $0x8] sm:$0xf]
    %v496 = vld [vmem:[#allocation10 + $0xc] sm:$0xf]
    %v497 = vld [vmem:[#allocation10 + $0x10] sm:$0xf]
    %v498 = vld [vmem:[#allocation10 + $0x14] sm:$0xf]
    %v499 = vld [vmem:[#allocation10 + $0x18] sm:$0xf]
    %v500 = vld [vmem:[#allocation10 + $0x1c] sm:$0xf]
    %v501 = vld [vmem:[#allocation10 + $0x20] sm:$0xf]
    %v502 = vld [vmem:[#allocation10 + $0x24] sm:$0xf]
    %v503 = vld [vmem:[#allocation10 + $0x28] sm:$0xf]
    %v504 = vld [vmem:[#allocation10 + $0x2c] sm:$0xf]
    %v505 = vld [vmem:[#allocation10 + $0x30] sm:$0xf]
    %v506 = vld [vmem:[#allocation10 + $0x34] sm:$0xf]
    %v507 = vld [vmem:[#allocation10 + $0x38] sm:$0xf]
    %v508 = vld [vmem:[#allocation10 + $0x3c] sm:$0xf]
    %v509 = vld [vmem:[%s8] sm:$0x1]
    %v511 = vlaneseq
    %v512 = vshrl.u32 %v511, 7
    %v513 = vsub.s32 0, %v512
    %v514 = vrot.slane %v509, %v513
    %v532 = vunpack.c.l.b16 %v493
    %v533 = vunpack.c.l.b16 %v494
    %v534 = vunpack.c.l.b16 %v495
    %v535 = vunpack.c.l.b16 %v496
    %v536 = vunpack.c.l.b16 %v497
    %v537 = vunpack.c.l.b16 %v498
    %v538 = vunpack.c.l.b16 %v499
    %v539 = vunpack.c.l.b16 %v500
    %v540 = vunpack.c.l.b16 %v501
    %v541 = vunpack.c.l.b16 %v502
    %v542 = vunpack.c.l.b16 %v503
    %v543 = vunpack.c.l.b16 %v504
    %v544 = vunpack.c.l.b16 %v505
    %v545 = vunpack.c.l.b16 %v506
    %v546 = vunpack.c.l.b16 %v507
    %v547 = vunpack.c.l.b16 %v508
    %v548 = vpack.c.b16 %v533, %v532
    %v549 = vpack.c.b16 %v535, %v534
    %v550 = vpack.c.b16 %v537, %v536
    %v551 = vpack.c.b16 %v539, %v538
    %v552 = vpack.c.b16 %v541, %v540
    %v553 = vpack.c.b16 %v543, %v542
    %v554 = vpack.c.b16 %v545, %v544
    %v555 = vpack.c.b16 %v547, %v546
    %564 = vmatprep.subr.bf16.mxu0 0
    %565 = vmatpush1.bf16.msra.mxu0 %v548
    %566 = vmatprep.subr.bf16.mxu0 0
    %567 = vmatpush1.bf16.msra.mxu0 %v549
    %568 = vmatprep.subr.bf16.mxu0 0
    %569 = vmatpush1.bf16.msra.mxu0 %v550
    %570 = vmatprep.subr.bf16.mxu0 0
    %571 = vmatpush1.bf16.msra.mxu0 %v551
    %572 = vmatprep.subr.bf16.mxu0 0
    %573 = vmatpush1.bf16.msra.mxu0 %v552
    %574 = vmatprep.subr.bf16.mxu0 0
    %575 = vmatpush1.bf16.msra.mxu0 %v553
    %576 = vmatprep.subr.bf16.mxu0 0
    %577 = vmatpush1.bf16.msra.mxu0 %v554
    %578 = vmatprep.subr.bf16.mxu0 0
    %579 = vmatpush1.bf16.msra.mxu0 %v555
    %580 = vmatprep.subr.bf16.mxu0 0
    %581 = vmatpush1.bf16.msra.mxu0 0
    %582 = vmatprep.subr.bf16.mxu0 0
    %583 = vmatpush1.bf16.msra.mxu0 0
    %584 = vmatprep.subr.bf16.mxu0 0
    %585 = vmatpush1.bf16.msra.mxu0 0
    %586 = vmatprep.subr.bf16.mxu0 0
    %587 = vmatpush1.bf16.msra.mxu0 0
    %588 = vmatprep.subr.bf16.mxu0 0
    %589 = vmatpush1.bf16.msra.mxu0 0
    %590 = vmatprep.subr.bf16.mxu0 0
    %591 = vmatpush1.bf16.msra.mxu0 0
    %592 = vmatprep.subr.bf16.mxu0 0
    %593 = vmatpush1.bf16.msra.mxu0 0
    %594 = vmatprep.subr.bf16.mxu0 0
    %595 = vmatpush1.bf16.msra.mxu0 0
    %596 = vmatprep.mubr.bf16.mxu0 0
    %597 = vmatmul.mubr.bf16.gmra.mrb[0].mxu0 %v492
    %v598 = vpop.f32.mrb[0].mxu0
    %v599 = vadd.f32 %v514, %v598
    %v600 = vpop.f32.mrb[0].mxu0
    %v601 = vpop.f32.mrb[0].mxu0
    %v602 = vpop.f32.mrb[0].mxu0
    %603 = vdwg.mxu0
    %v604 = vpack.c.bf16 %v599, %v599
    %605 = vst [vmem:[#allocation11] sm:$0xf] %v604
    // Predicated region
    $region58: #{tpu_custom_call.1} parent=1 // pred_check
      _
    $region59: #{tpu_custom_call.1} parent=1 // pred_check_branch
      %607 = sbr.rel (0) target = $region61
    $region60: #{tpu_custom_call.1} parent=1 // pred_region
      %s609 = ssub.s32 64, 64
      %610 = vsyncadd [#allocation4], %s609
      %s612 = sshll.u32 [#allocation11], 4
      %s613 = int_to_ptr.vmem [resolvable:$true] %s612
      %615 = dma.vmem_to_hbm [thread:$0]  %s613, 64, %s9, [#allocation4]
    $region61: #{tpu_custom_call.1} parent=1 // pred_fallthru
      _
    // Predicated region
    $region62: #{tpu_custom_call.1} parent=1 // pred_check
      _
    $region63: #{tpu_custom_call.1} parent=1 // pred_check_branch
      %617 = sbr.rel (0) target = $region65
    $region64: #{tpu_custom_call.1} parent=1 // pred_region
      %618 = dma.done [#allocation4], 64
    $region65: #{tpu_custom_call.1} parent=1 // pred_fallthru
      _
    %619 = vsyncpa [#allocation3], 1
    %620 = vsyncpa [#allocation6], 1
    %621 = vsyncpa [#allocation9], 1
    %622 = vsyncpa [#allocation4], 1

</llo_original>
